<compile_context>
chip_gen: v7x
topology: tpu7x:2x2x1
jax: 0.10.0
libtpu: 0.0.40
codegen_flags: <defaults>
</compile_context>

<pallas_src>
import functools
import math

import jax
import jax.numpy as jnp
from jax import lax
from jax.experimental import pallas as pl
from jax.experimental.pallas import tpu as pltpu

# ---- small synthetic config (stands in for codebert-base: hidden=768, 12 layers) ----
VOCAB = 128
HIDDEN = 32
N_LAYERS = 2
N_HEADS = 4
HEAD_DIM = HIDDEN // N_HEADS
INTERMEDIATE = 64
MAX_SEQ = 16
HEAD_NEURONS = (64, 64, 64)   # module uses [1024, 1024, 1024]; scaled down
N_CLASSES = 2
OUT_PAD = 128                 # pad final logits to a full 128-lane block (unmasked stores)
LN_EPS = 1e-12
NEG_INF = -1e9
ROW_TILE = 512                # row tile for the row-parallel kernels (fits v7x 64MiB VMEM
                              # with double-buffered intermediates at codebert scale too)

# TODO(synk): at codebert scale (768/3072) activations/weights would be stored bf16 with f32
# accumulation on v6e/v7x; kept f32 here at these tiny, non-128-aligned synthetic shapes.


# --------------------------------------------------------------------------------------
# helpers
# --------------------------------------------------------------------------------------
def _erf(x):
    # Abramowitz & Stegun 7.1.26 (|err| <= 1.5e-7); only exp/mul/add -> clean VPU/EUP lowering.
    a1, a2, a3, a4, a5 = 0.254829592, -0.284496736, 1.421413741, -1.453152027, 1.061405429
    p = 0.3275911
    sign = jnp.sign(x)
    xa = jnp.abs(x)
    t = 1.0 / (1.0 + p * xa)
    poly = ((((a5 * t + a4) * t + a3) * t + a2) * t + a1) * t
    return sign * (1.0 - poly * jnp.exp(-xa * xa))


def _gelu(x):
    return 0.5 * x * (1.0 + _erf(x * (1.0 / math.sqrt(2.0))))


def _leaky_relu(x):
    # torch.nn.LeakyReLU default negative_slope=0.01
    return jnp.where(x >= 0.0, x, 0.01 * x)


def _layernorm(h, gamma, beta):
    mu = jnp.mean(h, axis=-1, keepdims=True)
    xc = h - mu
    var = jnp.mean(xc * xc, axis=-1, keepdims=True)
    inv = lax.rsqrt(var + LN_EPS)
    return xc * inv * gamma + beta


# --------------------------------------------------------------------------------------
# Pallas kernels
# --------------------------------------------------------------------------------------
def _ln_kernel(x_ref, g_ref, b_ref, o_ref):
    """LayerNorm over last dim. x:(TM,D) g,b:(1,D)."""
    o_ref[...] = _layernorm(x_ref[...], g_ref[...], b_ref[...]).astype(o_ref.dtype)


def layernorm(x, gamma, beta):
    n, d = x.shape
    tm = min(ROW_TILE, n)
    assert n % tm == 0
    return pl.pallas_call(
        _ln_kernel,
        out_shape=jax.ShapeDtypeStruct((n, d), jnp.float32),
        grid=(n // tm,),
        in_specs=[
            pl.BlockSpec((tm, d), lambda i: (i, 0)),
            pl.BlockSpec((1, d), lambda i: (0, 0)),
            pl.BlockSpec((1, d), lambda i: (0, 0)),
        ],
        out_specs=pl.BlockSpec((tm, d), lambda i: (i, 0)),
        compiler_params=pltpu.CompilerParams(dimension_semantics=("parallel",)),
    )(x, gamma.reshape(1, d), beta.reshape(1, d))


def _attn_block_kernel(x_ref, m_ref, wqkv_ref, bqkv_ref, wo_ref, bo_ref, g_ref, b_ref, o_ref):
    """Fused attention sub-block for one batch element:
       x -> fused QKV matmul -> per-head softmax attention -> output proj -> +residual -> LN.
       x:(1,S,H)  mask:(1,1,S)  wqkv:(H,3H)  wo:(H,H)  out:(1,S,H) lane-dense."""
    x = x_ref[0]                                            # (S, H)
    mask = m_ref[0]                                         # (1, S) additive mask
    qkv = jnp.dot(x, wqkv_ref[...], preferred_element_type=jnp.float32) + bqkv_ref[...]
    wo = wo_ref[...]
    scale = 1.0 / math.sqrt(HEAD_DIM)

    # Per-head attention; output projection folded in as a sum over head blocks of wo
    # (ctx @ wo == sum_h ctx_h @ wo[h*HD:(h+1)*HD, :]) -> no in-kernel concat/transpose.
    attn_out = jnp.zeros((x.shape[0], HIDDEN), jnp.float32)
    for h in range(N_HEADS):
        q = qkv[:, h * HEAD_DIM:(h + 1) * HEAD_DIM]
        k = qkv[:, HIDDEN + h * HEAD_DIM:HIDDEN + (h + 1) * HEAD_DIM]
        v = qkv[:, 2 * HIDDEN + h * HEAD_DIM:2 * HIDDEN + (h + 1) * HEAD_DIM]
        s = lax.dot_general(q, k, (((1,), (1,)), ((), ())),
                            preferred_element_type=jnp.float32) * scale   # (S, S), q @ k.T
        s = s + mask
        mx = jnp.max(s, axis=-1, keepdims=True)
        p = jnp.exp(s - mx)
        p = p * pl.reciprocal(jnp.sum(p, axis=-1, keepdims=True), approx=True)
        ctx = jnp.dot(p, v, preferred_element_type=jnp.float32)           # (S, HD)
        attn_out = attn_out + jnp.dot(ctx, wo[h * HEAD_DIM:(h + 1) * HEAD_DIM, :],
                                      preferred_element_type=jnp.float32)
    attn_out = attn_out + bo_ref[...]

    o_ref[0] = _layernorm(attn_out + x, g_ref[...], b_ref[...]).astype(o_ref.dtype)


def attention_block(h, add_mask, lyr):
    b, s, d = h.shape
    return pl.pallas_call(
        _attn_block_kernel,
        out_shape=jax.ShapeDtypeStruct((b, s, d), jnp.float32),
        grid=(b,),
        in_specs=[
            pl.BlockSpec((1, s, d), lambda i: (i, 0, 0)),
            pl.BlockSpec((1, 1, s), lambda i: (i, 0, 0)),
            pl.BlockSpec((d, 3 * d), lambda i: (0, 0)),
            pl.BlockSpec((1, 3 * d), lambda i: (0, 0)),
            pl.BlockSpec((d, d), lambda i: (0, 0)),
            pl.BlockSpec((1, d), lambda i: (0, 0)),
            pl.BlockSpec((1, d), lambda i: (0, 0)),
            pl.BlockSpec((1, d), lambda i: (0, 0)),
        ],
        out_specs=pl.BlockSpec((1, s, d), lambda i: (i, 0, 0)),
        compiler_params=pltpu.CompilerParams(dimension_semantics=("parallel",)),
    )(h, add_mask,
      lyr["wqkv"], lyr["bqkv"].reshape(1, -1),
      lyr["wo"], lyr["bo"].reshape(1, -1),
      lyr["ln1_g"].reshape(1, -1), lyr["ln1_b"].reshape(1, -1))


def _ffn_block_kernel(x_ref, wi_ref, bi_ref, wf_ref, bf_ref, g_ref, b_ref, o_ref):
    """Fused FFN sub-block: GELU(x @ wi + bi) @ wf + bf, +residual, LayerNorm.
       x:(TM,H) wi:(H,I) wf:(I,H); intermediate never leaves VMEM/vregs."""
    x = x_ref[...]
    inter = jnp.dot(x, wi_ref[...], preferred_element_type=jnp.float32) + bi_ref[...]
    inter = _gelu(inter)
    ffn = jnp.dot(inter, wf_ref[...], preferred_element_type=jnp.float32) + bf_ref[...]
    o_ref[...] = _layernorm(ffn + x, g_ref[...], b_ref[...]).astype(o_ref.dtype)


def ffn_block(x, lyr):
    n, d = x.shape
    tm = min(ROW_TILE, n)
    assert n % tm == 0
    return pl.pallas_call(
        _ffn_block_kernel,
        out_shape=jax.ShapeDtypeStruct((n, d), jnp.float32),
        grid=(n // tm,),
        in_specs=[
            pl.BlockSpec((tm, d), lambda i: (i, 0)),
            pl.BlockSpec((d, INTERMEDIATE), lambda i: (0, 0)),
            pl.BlockSpec((1, INTERMEDIATE), lambda i: (0, 0)),
            pl.BlockSpec((INTERMEDIATE, d), lambda i: (0, 0)),
            pl.BlockSpec((1, d), lambda i: (0, 0)),
            pl.BlockSpec((1, d), lambda i: (0, 0)),
            pl.BlockSpec((1, d), lambda i: (0, 0)),
        ],
        out_specs=pl.BlockSpec((tm, d), lambda i: (i, 0)),
        compiler_params=pltpu.CompilerParams(dimension_semantics=("parallel",)),
    )(x, lyr["wi"], lyr["bi"].reshape(1, -1), lyr["wf"], lyr["bf"].reshape(1, -1),
      lyr["ln2_g"].reshape(1, -1), lyr["ln2_b"].reshape(1, -1))


def _pooler_head_kernel(x_ref, pw_ref, pb_ref, w1_ref, b1_ref, w2_ref, b2_ref,
                        w3_ref, b3_ref, o_ref):
    """Fused BERT pooler (tanh dense on [CLS]) + 3-layer LeakyReLU classifier head.
       Final Linear weight is zero-padded to OUT_PAD lanes so the store is unmasked;
       dropout layers are identity (eval mode)."""
    x = x_ref[...]                                                         # (B, H)
    pooled = jnp.tanh(jnp.dot(x, pw_ref[...], preferred_element_type=jnp.float32)
                      + pb_ref[...])
    h1 = _leaky_relu(jnp.dot(pooled, w1_ref[...], preferred_element_type=jnp.float32)
                     + b1_ref[...])
    h2 = _leaky_relu(jnp.dot(h1, w2_ref[...], preferred_element_type=jnp.float32)
                     + b2_ref[...])
    logits = _leaky_relu(jnp.dot(h2, w3_ref[...], preferred_element_type=jnp.float32)
                         + b3_ref[...])                                    # (B, OUT_PAD)
    o_ref[...] = logits.astype(o_ref.dtype)


def pooler_head(cls_tokens, params):
    b, d = cls_tokens.shape
    (w1, b1), (w2, b2), (w3p, b3p) = params["head"]
    n1, n2 = w1.shape[1], w2.shape[1]
    return pl.pallas_call(
        _pooler_head_kernel,
        out_shape=jax.ShapeDtypeStruct((b, OUT_PAD), jnp.float32),
        grid=(1,),
        in_specs=[
            pl.BlockSpec((b, d), lambda i: (0, 0)),
            pl.BlockSpec((d, d), lambda i: (0, 0)),
            pl.BlockSpec((1, d), lambda i: (0, 0)),
            pl.BlockSpec((d, n1), lambda i: (0, 0)),
            pl.BlockSpec((1, n1), lambda i: (0, 0)),
            pl.BlockSpec((n1, n2), lambda i: (0, 0)),
            pl.BlockSpec((1, n2), lambda i: (0, 0)),
            pl.BlockSpec((n2, OUT_PAD), lambda i: (0, 0)),
            pl.BlockSpec((1, OUT_PAD), lambda i: (0, 0)),
        ],
        out_specs=pl.BlockSpec((b, OUT_PAD), lambda i: (0, 0)),
    )(cls_tokens, params["pool_w"], params["pool_b"].reshape(1, d),
      w1, b1.reshape(1, n1), w2, b2.reshape(1, n2), w3p, b3p)


# --------------------------------------------------------------------------------------
# Parameters (deterministic synthetic init — no checkpoint load)
# --------------------------------------------------------------------------------------
def _dense_init(key, fan_in, fan_out):
    w = jax.random.normal(key, (fan_in, fan_out), jnp.float32) * 0.02
    b = jnp.zeros((fan_out,), jnp.float32)
    return w, b


def init_params(key):
    keys = iter(jax.random.split(key, 4 + 8 * N_LAYERS + len(HEAD_NEURONS)))
    params = {
        "word_emb": jax.random.normal(next(keys), (VOCAB, HIDDEN), jnp.float32) * 0.02,
        "pos_emb": jax.random.normal(next(keys), (MAX_SEQ, HIDDEN), jnp.float32) * 0.02,
        "type_emb": jax.random.normal(next(keys), (2, HIDDEN), jnp.float32) * 0.02,
        "emb_ln_g": jnp.ones((HIDDEN,), jnp.float32),
        "emb_ln_b": jnp.zeros((HIDDEN,), jnp.float32),
        "layers": [],
        "head": [],
    }
    for _ in range(N_LAYERS):
        wq, bq = _dense_init(next(keys), HIDDEN, HIDDEN)
        wk, bk = _dense_init(next(keys), HIDDEN, HIDDEN)
        wv, bv = _dense_init(next(keys), HIDDEN, HIDDEN)
        wo, bo = _dense_init(next(keys), HIDDEN, HIDDEN)
        wi, bi = _dense_init(next(keys), HIDDEN, INTERMEDIATE)
        wf, bf = _dense_init(next(keys), INTERMEDIATE, HIDDEN)
        params["layers"].append(dict(
            # fused QKV weight/bias: one (H, 3H) matmul per layer
            wqkv=jnp.concatenate([wq, wk, wv], axis=1),
            bqkv=jnp.concatenate([bq, bk, bv], axis=0),
            wo=wo, bo=bo, wi=wi, bi=bi, wf=wf, bf=bf,
            ln1_g=jnp.ones((HIDDEN,), jnp.float32), ln1_b=jnp.zeros((HIDDEN,), jnp.float32),
            ln2_g=jnp.ones((HIDDEN,), jnp.float32), ln2_b=jnp.zeros((HIDDEN,), jnp.float32),
        ))
    params["pool_w"], params["pool_b"] = _dense_init(next(keys), HIDDEN, HIDDEN)
    # MultiLayerClassifierHead(input=HIDDEN, output=2, neurons=HEAD_NEURONS, leakyrelu)
    assert len(HEAD_NEURONS) == 3
    w1, b1 = _dense_init(next(keys), HIDDEN, HEAD_NEURONS[0])
    w2, b2 = _dense_init(next(keys), HEAD_NEURONS[0], HEAD_NEURONS[1])
    w3, b3 = _dense_init(next(keys), HEAD_NEURONS[1], N_CLASSES)
    # zero-pad the final Linear to OUT_PAD lanes (extra columns produce 0 -> sliced off)
    w3p = jnp.zeros((HEAD_NEURONS[1], OUT_PAD), jnp.float32).at[:, :N_CLASSES].set(w3)
    b3p = jnp.zeros((1, OUT_PAD), jnp.float32).at[:, :N_CLASSES].set(b3.reshape(1, -1))
    params["head"] = [(w1, b1), (w2, b2), (w3p, b3p)]
    return params


# --------------------------------------------------------------------------------------
# Forward pass (mirrors BertBinaryClassifier.forward)
# --------------------------------------------------------------------------------------
def bert_binary_classifier_forward(params, input_ids, attention_mask):
    b, s = input_ids.shape
    n = b * s

    # --- embeddings (gather is JAX glue; LayerNorm in Pallas) ---
    emb = (params["word_emb"][input_ids]
           + params["pos_emb"][jnp.arange(s)][None, :, :]
           + params["type_emb"][0][None, None, :])
    h = layernorm(emb.reshape(n, HIDDEN),
                  params["emb_ln_g"], params["emb_ln_b"]).reshape(b, s, HIDDEN)

    # additive attention mask, (B,1,S): 0 where attended, -1e9 where masked
    add_mask = ((1.0 - attention_mask.astype(jnp.float32)) * NEG_INF).reshape(b, 1, s)

    # --- transformer encoder layers: 2 fused pallas_calls per layer ---
    for lyr in params["layers"]:
        h = attention_block(h, add_mask, lyr)                        # (B,S,H)
        h = ffn_block(h.reshape(n, HIDDEN), lyr).reshape(b, s, HIDDEN)

    # --- fused BERT pooler + MultiLayerClassifierHead (dropout = identity in eval) ---
    # TODO(synk): train-mode stochastic dropout not implemented.
    logits_padded = pooler_head(h[:, 0, :], params)                  # (B, OUT_PAD)
    return logits_padded[:, :N_CLASSES]


if __name__ == "__main__":
    key = jax.random.PRNGKey(0)
    k_params, k_ids = jax.random.split(key)
    params = init_params(k_params)

    B, S = 2, 8
    input_ids = jax.random.randint(k_ids, (B, S), 0, VOCAB, dtype=jnp.int32)
    attention_mask = jnp.array([[1, 1, 1, 1, 1, 1, 1, 1],
                                [1, 1, 1, 1, 1, 1, 0, 0]], dtype=jnp.int32)

    logits = bert_binary_classifier_forward(params, input_ids, attention_mask)
    logits = jax.block_until_ready(logits)

    assert logits.shape == (B, N_CLASSES), logits.shape
    assert bool(jnp.all(jnp.isfinite(logits)))
    print("KERNEL_OK")
</pallas_src>

<mosaic_0001>
module attributes {stable_mosaic.version = 11 : i64} {
  func.func @_ln_kernel(%arg0: i32, %arg1: memref<16x32xf32, #tpu.memory_space<vmem>>, %arg2: memref<1x32xf32, #tpu.memory_space<vmem>>, %arg3: memref<1x32xf32, #tpu.memory_space<vmem>>, %arg4: memref<16x32xf32, #tpu.memory_space<vmem>>) attributes {dimension_semantics = [#tpu.dimension_semantics<parallel>], iteration_bounds = array<i64: 1>, scalar_prefetch = 0 : i64, scratch_operands = 0 : i64, tpu.core_type = #tpu.core_type<tc>, window_params = [{transform_indices = @transform_0, window_bounds = array<i64: 16, 32>}, {pipeline_mode = #tpu.pipeline_mode<synchronous>, transform_indices = @transform_1, window_bounds = array<i64: 1, 32>}, {pipeline_mode = #tpu.pipeline_mode<synchronous>, transform_indices = @transform_2, window_bounds = array<i64: 1, 32>}, {transform_indices = @transform_3, window_bounds = array<i64: 16, 32>}]} {
    %c0 = arith.constant 0 : index
    %c0_0 = arith.constant 0 : index
    %0 = vector.load %arg1[%c0, %c0_0] : memref<16x32xf32, #tpu.memory_space<vmem>>, vector<16x32xf32>
    %c0_1 = arith.constant 0 : index
    %c0_2 = arith.constant 0 : index
    %1 = vector.load %arg2[%c0_1, %c0_2] : memref<1x32xf32, #tpu.memory_space<vmem>>, vector<1x32xf32>
    %c0_3 = arith.constant 0 : index
    %c0_4 = arith.constant 0 : index
    %2 = vector.load %arg3[%c0_3, %c0_4] : memref<1x32xf32, #tpu.memory_space<vmem>>, vector<1x32xf32>
    %cst = arith.constant dense<0.000000e+00> : vector<16xf32>
    %3 = vector.multi_reduction <add>, %0, %cst [1] : vector<16x32xf32> to vector<16xf32>
    %4 = vector.shape_cast %3 : vector<16xf32> to vector<16x1xf32>
    %cst_5 = arith.constant 3.200000e+01 : f32
    %5 = vector.broadcast %cst_5 : f32 to vector<16x1xf32>
    %6 = arith.divf %4, %5 : vector<16x1xf32>
    %7 = vector.broadcast %6 : vector<16x1xf32> to vector<16x32xf32>
    %8 = arith.subf %0, %7 : vector<16x32xf32>
    %9 = arith.mulf %8, %8 : vector<16x32xf32>
    %cst_6 = arith.constant dense<0.000000e+00> : vector<16xf32>
    %10 = vector.multi_reduction <add>, %9, %cst_6 [1] : vector<16x32xf32> to vector<16xf32>
    %11 = vector.shape_cast %10 : vector<16xf32> to vector<16x1xf32>
    %cst_7 = arith.constant 3.200000e+01 : f32
    %12 = vector.broadcast %cst_7 : f32 to vector<16x1xf32>
    %13 = arith.divf %11, %12 : vector<16x1xf32>
    %cst_8 = arith.constant 9.99999996E-13 : f32
    %14 = vector.broadcast %cst_8 : f32 to vector<16x1xf32>
    %15 = arith.addf %13, %14 : vector<16x1xf32>
    %16 = math.rsqrt %15 : vector<16x1xf32>
    %17 = vector.broadcast %16 : vector<16x1xf32> to vector<16x32xf32>
    %18 = arith.mulf %8, %17 : vector<16x32xf32>
    %19 = vector.broadcast %1 : vector<1x32xf32> to vector<16x32xf32>
    %20 = arith.mulf %18, %19 : vector<16x32xf32>
    %21 = vector.broadcast %2 : vector<1x32xf32> to vector<16x32xf32>
    %22 = arith.addf %20, %21 : vector<16x32xf32>
    %c0_9 = arith.constant 0 : index
    %c0_10 = arith.constant 0 : index
    %23 = vector.load %arg4[%c0_9, %c0_10] : memref<16x32xf32, #tpu.memory_space<vmem>>, vector<16x32xf32>
    tpu.vector_store %arg4[%c0_9, %c0_10], %22 {strides = array<i32>} : memref<16x32xf32, #tpu.memory_space<vmem>>, vector<16x32xf32>,
    return
  }
  func.func @transform_0(%arg0: i32) -> (i32, i32) {
    %c0_i32 = arith.constant 0 : i32
    %c0_i32_0 = arith.constant 0 : i32
    return %arg0, %c0_i32 : i32, i32
  }
  func.func @transform_1(%arg0: i32) -> (i32, i32) {
    %c0_i32 = arith.constant 0 : i32
    %c0_i32_0 = arith.constant 0 : i32
    %c0_i32_1 = arith.constant 0 : i32
    return %c0_i32, %c0_i32_0 : i32, i32
  }
  func.func @transform_2(%arg0: i32) -> (i32, i32) {
    %c0_i32 = arith.constant 0 : i32
    %c0_i32_0 = arith.constant 0 : i32
    %c0_i32_1 = arith.constant 0 : i32
    return %c0_i32, %c0_i32_0 : i32, i32
  }
  func.func @transform_3(%arg0: i32) -> (i32, i32) {
    %c0_i32 = arith.constant 0 : i32
    %c0_i32_0 = arith.constant 0 : i32
    return %arg0, %c0_i32 : i32, i32
  }
}

</mosaic_0001>

<llo_original>
// kernel: tpu_custom_call.1
$region0: #{tpu_custom_call.1}
  #allocation0 [shape = 'u32[]', space=smem, size = 0x4, offset = 0x4, fixed_abs, tag = 'smem constant byte address 0x4 - core index']
  #allocation1 [shape = 'u32[144,128]{1,0:T(1,128)}', space=vmem, size = 0x12000, scoped, tag = 'internal scratch']
  %s0 = inlined_call_operand.hbm [shape: f32[16,32], index: 0, kind: input, shape index: {}]
  %s1 = inlined_call_operand.vmem [shape: f32[1,32], index: 1, kind: input, shape index: {}]
  %s2 = inlined_call_operand.vmem [shape: f32[1,32], index: 2, kind: input, shape index: {}]
  %s3 = inlined_call_operand.hbm [shape: f32[16,32], index: 3, kind: output, shape index: {}]
  %s4 = sld [smem:[#allocation0]]
  $region26: #{tpu_custom_call.1} parent=0
    _
  %s6 = ssub.s32 1, %s4
  %s7 = scalar_select 0, %s6, %s4
  $region1: #{tpu_custom_call.1} parent=0
    #allocation2 [shape = 'u8[8192]{0}', space=vmem, size = 0x2000, scoped, tag = 'input window, operand 0, single buffered']
    #allocation3 [shape = 's32[1]{0}', space=sflag, size = 0x4, scoped, tag = 'scoped memory for tpu_custom_call.1']
    #allocation4 [shape = 's32[1]{0}', space=sflag, size = 0x4, scoped, tag = 'scoped memory for tpu_custom_call.1']
    #allocation5 [shape = 'u8[8192]{0}', space=vmem, size = 0x2000, scoped, tag = 'output window, operand 0, single buffered']
    %8 = vsyncpa [#allocation3], 0
    %9 = vsyncpa [#allocation4], 0
    // Predicated region
    $region2: #{tpu_custom_call.1} parent=1 // pred_check
      _
    $region3: #{tpu_custom_call.1} parent=1 // pred_check_branch
      %11 = sbr.rel (0) target = $region5
    $region4: #{tpu_custom_call.1} parent=1 // pred_region
      %s13 = ssub.s32 256, 256
      %14 = vsyncadd [#allocation3], %s13
      %s15 = sshll.u32 [#allocation2], 4
      %s16 = int_to_ptr.vmem [resolvable:$true] %s15
      %21 = dma.hbm_to_vmem [thread:$0]  %s0, 256, %s16, [#allocation3], 128, 128, 8
    $region5: #{tpu_custom_call.1} parent=1 // pred_fallthru
      _
    // Predicated region
    $region6: #{tpu_custom_call.1} parent=1 // pred_check
      _
    $region7: #{tpu_custom_call.1} parent=1 // pred_check_branch
      %23 = sbr.rel (0) target = $region9
    $region8: #{tpu_custom_call.1} parent=1 // pred_region
      _
    $region9: #{tpu_custom_call.1} parent=1 // pred_fallthru
      _
    // Predicated region
    $region10: #{tpu_custom_call.1} parent=1 // pred_check
      _
    $region11: #{tpu_custom_call.1} parent=1 // pred_check_branch
      %25 = sbr.rel (0) target = $region13
    $region12: #{tpu_custom_call.1} parent=1 // pred_region
      _
    $region13: #{tpu_custom_call.1} parent=1 // pred_fallthru
      _
    // Predicated region
    $region14: #{tpu_custom_call.1} parent=1 // pred_check
      _
    $region15: #{tpu_custom_call.1} parent=1 // pred_check_branch
      %27 = sbr.rel (0) target = $region17
    $region16: #{tpu_custom_call.1} parent=1 // pred_region
      %28 = dma.done [#allocation3], 256
    $region17: #{tpu_custom_call.1} parent=1 // pred_fallthru
      _
    %v29 = vld [vmem:[#allocation2] sm:$0xff]
    %v30 = vld [vmem:[#allocation2 + $0x8] sm:$0xff]
    %v31 = vld [vmem:[%s1] sm:$0x1]
    %v32 = vld [vmem:[%s2] sm:$0x1]
    %vm33 = vcmask 261120
    %v34 = vsel %vm33, %v29, 0.0
    %35 = vadd.xlane.f32.xlu0 %v34
    %v36 = vpop.xlane.xlu0 %35
    %v37 = vsel %vm33, %v30, 0.0
    %38 = vadd.xlane.f32.xlu0 %v37
    %v39 = vpop.xlane.xlu0 %38
    %v40 = vrcp.pop 32.0
    %v41 = vmul.f32 %v36, %v40
    %v42 = vmul.f32 %v39, %v40
    %v43 = vsub.f32 %v29, %v41
    %v44 = vsub.f32 %v30, %v42
    %v45 = vmul.f32 %v43, %v43
    %v46 = vmul.f32 %v44, %v44
    %v47 = vsel %vm33, %v45, 0.0
    %48 = vadd.xlane.f32.xlu0 %v47
    %v49 = vpop.xlane.xlu0 %48
    %v50 = vsel %vm33, %v46, 0.0
    %51 = vadd.xlane.f32.xlu0 %v50
    %v52 = vpop.xlane.xlu0 %51
    %v53 = vmul.f32 %v49, %v40
    %v54 = vmul.f32 %v52, %v40
    %v55 = vadd.f32 %v53, 1e-12
    %v56 = vadd.f32 %v54, 1e-12
    %v57 = vrsqrt.pop %v55
    %v58 = vrsqrt.pop %v56
    %v59 = vmul.f32 %v43, %v57
    %v60 = vmul.f32 %v44, %v58
    %v62 = vlaneseq
    %v63 = vshrl.u32 %v62, 7
    %v64 = vsub.s32 0, %v63
    %v65 = vrot.slane %v31, %v64
    %v67 = vmul.f32 %v59, %v65
    %v68 = vmul.f32 %v60, %v65
    %v70 = vlaneseq
    %v71 = vshrl.u32 %v70, 7
    %v72 = vsub.s32 0, %v71
    %v73 = vrot.slane %v32, %v72
    %v75 = vadd.f32 %v67, %v73
    %v76 = vadd.f32 %v68, %v73
    %77 = vst.msk [vmem:[#allocation5] sm:$0xff] %vm33, %v75
    %78 = vst.msk [vmem:[#allocation5 + $0x8] sm:$0xff] %vm33, %v76
    // Predicated region
    $region18: #{tpu_custom_call.1} parent=1 // pred_check
      _
    $region19: #{tpu_custom_call.1} parent=1 // pred_check_branch
      %80 = sbr.rel (0) target = $region21
    $region20: #{tpu_custom_call.1} parent=1 // pred_region
      %s82 = ssub.s32 256, 256
      %83 = vsyncadd [#allocation4], %s82
      %s84 = sshll.u32 [#allocation5], 4
      %s85 = int_to_ptr.vmem [resolvable:$true] %s84
      %90 = dma.vmem_to_hbm [thread:$0]  %s85, 256, %s3, [#allocation4], 128, 128, 8
    $region21: #{tpu_custom_call.1} parent=1 // pred_fallthru
      _
    // Predicated region
    $region22: #{tpu_custom_call.1} parent=1 // pred_check
      _
    $region23: #{tpu_custom_call.1} parent=1 // pred_check_branch
      %92 = sbr.rel (0) target = $region25
    $region24: #{tpu_custom_call.1} parent=1 // pred_region
      %93 = dma.done [#allocation4], 256
    $region25: #{tpu_custom_call.1} parent=1 // pred_fallthru
      _
    %94 = vsyncpa [#allocation3], 1
    %95 = vsyncpa [#allocation4], 1

</llo_original>
